<compile_context>
chip_gen: v5e
topology: v5e:2x2
jax: 0.10.0
libtpu: 0.0.40
codegen_flags: <defaults>
</compile_context>

<pallas_src>
import jax
import jax.numpy as jnp
from jax.experimental import pallas as pl
from jax.experimental.pallas import tpu as pltpu

LANE = 128  # TPU lane width; classifier output columns padded to a multiple of this.


def classifier_kernel(img_ref, txt_ref, a_img_ref, a_txt_ref, bias_ref, out_ref):
    """out = img @ A_img + txt @ A_txt + c   (single folded linear stage, f32 accumulation)."""
    acc = jnp.dot(
        img_ref[...],
        a_img_ref[...].astype(jnp.float32),
        preferred_element_type=jnp.float32,
    )
    acc = acc + jnp.dot(
        txt_ref[...],
        a_txt_ref[...].astype(jnp.float32),
        preferred_element_type=jnp.float32,
    )
    # Lane-dense (multiple-of-128 columns) unmasked store.
    out_ref[...] = (acc + bias_ref[...]).astype(out_ref.dtype)


def pack_params(params, param_dtype=jnp.bfloat16):
    """One-time (init) packing.

    Folds img_fc/txt_fc with the classifier (no nonlinearity in between) and pads the
    classifier output dimension to a multiple of 128 lanes.  Folded weights stored in
    `param_dtype` (bf16 by default) to halve weight DMA bytes; bias kept f32.
    """
    fusion_dim, num_classes = params["w_cls"].shape
    pad_cols = pl.cdiv(num_classes, LANE) * LANE

    w_cls_pad = (
        jnp.zeros((fusion_dim, pad_cols), jnp.float32)
        .at[:, :num_classes].set(params["w_cls"])
    )
    b_cls_pad = (
        jnp.zeros((1, pad_cols), jnp.float32)
        .at[:, :num_classes].set(params["b_cls"])
    )

    # Fold in f32, then cast weights to param_dtype for storage.
    a_img = (params["w_img"] @ w_cls_pad).astype(param_dtype)      # (img_dim, pad_cols)
    a_txt = (params["w_txt"] @ w_cls_pad).astype(param_dtype)      # (txt_dim, pad_cols)
    b_fold = (params["b_img"] + params["b_txt"]) @ w_cls_pad + b_cls_pad  # (1, pad_cols) f32

    return dict(a_img=a_img, a_txt=a_txt, b_fold=b_fold, num_classes=num_classes)


def custom_classifier_no_external(img_features, txt_features, packed, *, return_padded=False):
    """JAX wrapper mirroring CustomClassifiernoExternal.forward.

    With return_padded=True the raw lane-dense (B, pad_cols) slab is returned (columns
    >= num_classes are exact zero-weight logits); downstream consumers can mask instead
    of paying a separate slice op.
    """
    B = img_features.shape[0]
    txt2d = txt_features.reshape(B, -1)          # .view(B, -1) equivalent (free reshape)

    pad_cols = packed["a_img"].shape[1]
    vmem = pl.BlockSpec(memory_space=pltpu.MemorySpace.VMEM)

    out_padded = pl.pallas_call(
        classifier_kernel,
        out_shape=jax.ShapeDtypeStruct((B, pad_cols), jnp.float32),
        in_specs=[vmem] * 5,
        out_specs=vmem,
    )(img_features, txt2d, packed["a_img"], packed["a_txt"], packed["b_fold"])

    if return_padded:
        return out_padded
    return out_padded[:, :packed["num_classes"]]


def _reference(img, txt, params):
    """Pure-JAX f32 reference mirroring the PyTorch module exactly."""
    B = img.shape[0]
    txt2d = txt.reshape(B, -1)
    img_f = img @ params["w_img"] + params["b_img"]
    txt_f = txt2d @ params["w_txt"] + params["b_txt"]
    fusion = img_f + txt_f
    return fusion @ params["w_cls"] + params["b_cls"]


def init_params(key, img_dim, txt_dim, fusion_dim, num_classes):
    ks = jax.random.split(key, 6)

    def lin(kw, kb, fan_in, fan_out):
        bound = 1.0 / jnp.sqrt(fan_in)
        w = jax.random.uniform(kw, (fan_in, fan_out), jnp.float32, -bound, bound)
        b = jax.random.uniform(kb, (1, fan_out), jnp.float32, -bound, bound)
        return w, b

    w_img, b_img = lin(ks[0], ks[1], img_dim, fusion_dim)
    w_txt, b_txt = lin(ks[2], ks[3], txt_dim, fusion_dim)
    w_cls, b_cls = lin(ks[4], ks[5], fusion_dim, num_classes)
    return dict(
        w_img=w_img, b_img=b_img,
        w_txt=w_txt, b_txt=b_txt,
        w_cls=w_cls, b_cls=b_cls,
    )


if __name__ == "__main__":
    key = jax.random.PRNGKey(0)
    k_img, k_txt, k_params = jax.random.split(key, 3)

    B = 8
    img_dim, txt_dim = 32, 24
    fusion_dim, num_classes = 32, 2

    img = jax.random.normal(k_img, (B, img_dim), jnp.float32)
    # txt comes in with extra dims and gets .view(B, -1)-flattened; mimic that:
    txt = jax.random.normal(k_txt, (B, 4, 6), jnp.float32)  # -> (B, 24)

    params = init_params(k_params, img_dim, txt_dim, fusion_dim, num_classes)
    packed = pack_params(params)  # bf16 folded weights by default

    # Production path: lane-dense padded slab, no post-kernel slice op.
    out_padded = custom_classifier_no_external(img, txt, packed, return_padded=True)
    out_padded = jax.block_until_ready(out_padded)

    out = out_padded[:, :num_classes]  # test-only glue for the comparison below
    ref = _reference(img, txt, params)

    assert out_padded.shape == (B, pl.cdiv(num_classes, LANE) * LANE), out_padded.shape
    assert out.shape == (B, num_classes), out.shape
    # bf16-stored folded weights + fold reassociation => loosened tolerance vs f32 reference.
    assert jnp.allclose(out, ref, atol=3e-2, rtol=3e-2), "mismatch vs pure-JAX reference"
    # Padded columns carry only zero-weight contributions (exactly zero logits).
    assert jnp.allclose(out_padded[:, num_classes:], 0.0), "padded lanes not zero"

    print("KERNEL_OK")
</pallas_src>

<mosaic_0001>
module attributes {stable_mosaic.version = 11 : i64} {
  func.func @classifier_kernel(%arg0: memref<8x32xf32, #tpu.memory_space<vmem>>, %arg1: memref<8x24xf32, #tpu.memory_space<vmem>>, %arg2: memref<32x128xbf16, #tpu.memory_space<vmem>>, %arg3: memref<24x128xbf16, #tpu.memory_space<vmem>>, %arg4: memref<1x128xf32, #tpu.memory_space<vmem>>, %arg5: memref<8x128xf32, #tpu.memory_space<vmem>>) attributes {dimension_semantics = [], scalar_prefetch = 0 : i64, scratch_operands = 0 : i64, tpu.core_type = #tpu.core_type<tc>} {
    %c0 = arith.constant 0 : index
    %c0_0 = arith.constant 0 : index
    %0 = vector.load %arg0[%c0, %c0_0] : memref<8x32xf32, #tpu.memory_space<vmem>>, vector<8x32xf32>
    %c0_1 = arith.constant 0 : index
    %c0_2 = arith.constant 0 : index
    %1 = vector.load %arg2[%c0_1, %c0_2] : memref<32x128xbf16, #tpu.memory_space<vmem>>, vector<32x128xbf16>
    %2 = arith.extf %1 : vector<32x128xbf16> to vector<32x128xf32>
    %cst = arith.constant dense<0.000000e+00> : vector<8x128xf32>
    %3 = tpu.matmul %0, %2, %cst {dimension_numbers = #tpu.dot_dimension_numbers<[1], [0], [0], [1], [0, 0, 1, 1], [], []>} : vector<8x32xf32>, vector<32x128xf32>, vector<8x128xf32> -> vector<8x128xf32>
    %c0_3 = arith.constant 0 : index
    %c0_4 = arith.constant 0 : index
    %4 = vector.load %arg1[%c0_3, %c0_4] : memref<8x24xf32, #tpu.memory_space<vmem>>, vector<8x24xf32>
    %c0_5 = arith.constant 0 : index
    %c0_6 = arith.constant 0 : index
    %5 = vector.load %arg3[%c0_5, %c0_6] : memref<24x128xbf16, #tpu.memory_space<vmem>>, vector<24x128xbf16>
    %6 = arith.extf %5 : vector<24x128xbf16> to vector<24x128xf32>
    %cst_7 = arith.constant dense<0.000000e+00> : vector<8x128xf32>
    %7 = tpu.matmul %4, %6, %cst_7 {dimension_numbers = #tpu.dot_dimension_numbers<[1], [0], [0], [1], [0, 0, 1, 1], [], []>} : vector<8x24xf32>, vector<24x128xf32>, vector<8x128xf32> -> vector<8x128xf32>
    %8 = arith.addf %3, %7 : vector<8x128xf32>
    %c0_8 = arith.constant 0 : index
    %c0_9 = arith.constant 0 : index
    %9 = vector.load %arg4[%c0_8, %c0_9] : memref<1x128xf32, #tpu.memory_space<vmem>>, vector<1x128xf32>
    %10 = vector.broadcast %9 : vector<1x128xf32> to vector<8x128xf32>
    %11 = arith.addf %8, %10 : vector<8x128xf32>
    %c0_10 = arith.constant 0 : index
    %c0_11 = arith.constant 0 : index
    %12 = vector.load %arg5[%c0_10, %c0_11] : memref<8x128xf32, #tpu.memory_space<vmem>>, vector<8x128xf32>
    tpu.vector_store %arg5[%c0_10, %c0_11], %11 {strides = array<i32>} : memref<8x128xf32, #tpu.memory_space<vmem>>, vector<8x128xf32>,
    return
  }
}

</mosaic_0001>

<llo_original>
// kernel: tpu_custom_call.1
$region0: #{tpu_custom_call.1}
  #allocation0 [shape = 'u32[]', space=smem, size = 0x4, offset = 0x4, fixed_abs, tag = 'smem constant byte address 0x4 - core index']
  #allocation1 [shape = 'u32[72,128]{1,0:T(1,128)}', space=vmem, size = 0x9000, scoped, tag = 'internal scratch']
  %s0 = inlined_call_operand.hbm [shape: f32[8,32], index: 0, kind: input, shape index: {}]
  %s1 = inlined_call_operand.hbm [shape: f32[8,24], index: 1, kind: input, shape index: {}]
  %s2 = inlined_call_operand.hbm [shape: bf16[32,128], index: 2, kind: input, shape index: {}]
  %s3 = inlined_call_operand.hbm [shape: bf16[24,128], index: 3, kind: input, shape index: {}]
  %s4 = inlined_call_operand.vmem [shape: f32[1,128], index: 4, kind: input, shape index: {}]
  %s5 = inlined_call_operand.hbm [shape: f32[8,128], index: 5, kind: output, shape index: {}]
  %s6 = sld [smem:[#allocation0]]
  $region46: #{tpu_custom_call.1} parent=0
    _
  %s8 = ssub.s32 1, %s6
  %s9 = scalar_select 0, %s8, %s6
  $region1: #{tpu_custom_call.1} parent=0
    #allocation2 [shape = 'u8[4096]{0}', space=vmem, size = 0x1000, scoped, tag = 'input window, operand 0, single buffered']
    #allocation3 [shape = 's32[1]{0}', space=sflag, size = 0x4, scoped, tag = 'scoped memory for tpu_custom_call.1']
    #allocation4 [shape = 's32[1]{0}', space=sflag, size = 0x4, scoped, tag = 'scoped memory for tpu_custom_call.1']
    #allocation5 [shape = 'u8[4096]{0}', space=vmem, size = 0x1000, scoped, tag = 'input window, operand 1, single buffered']
    #allocation6 [shape = 's32[1]{0}', space=sflag, size = 0x4, scoped, tag = 'scoped memory for tpu_custom_call.1']
    #allocation7 [shape = 'u8[8192]{0}', space=vmem, size = 0x2000, scoped, tag = 'input window, operand 2, single buffered']
    #allocation8 [shape = 'u8[6144]{0}', space=vmem, size = 0x1800, scoped, tag = 'input window, operand 3, single buffered']
    #allocation9 [shape = 's32[1]{0}', space=sflag, size = 0x4, scoped, tag = 'scoped memory for tpu_custom_call.1']
    #allocation10 [shape = 'u8[4096]{0}', space=vmem, size = 0x1000, scoped, tag = 'output window, operand 0, single buffered']
    %10 = vsyncpa [#allocation3], 0
    %11 = vsyncpa [#allocation6], 0
    %12 = vsyncpa [#allocation9], 0
    %13 = vsyncpa [#allocation4], 0
    // Predicated region
    $region2: #{tpu_custom_call.1} parent=1 // pred_check
      _
    $region3: #{tpu_custom_call.1} parent=1 // pred_check_branch
      %15 = sbr.rel (0) target = $region5
    $region4: #{tpu_custom_call.1} parent=1 // pred_region
      %17 = vsyncadd [#allocation3], 0
      %s19 = sshll.u32 %s0, 4
      %s20 = int_to_ptr.hbm [resolvable:$true] %s19
      %s21 = sshll.u32 [#allocation2], 4
      %s22 = int_to_ptr.vmem [resolvable:$true] %s21
      %24 = dma.hbm_to_vmem [thread:$0]  %s20, 128, %s22, [#allocation3]
    $region5: #{tpu_custom_call.1} parent=1 // pred_fallthru
      _
    // Predicated region
    $region6: #{tpu_custom_call.1} parent=1 // pred_check
      _
    $region7: #{tpu_custom_call.1} parent=1 // pred_check_branch
      %26 = sbr.rel (0) target = $region9
    $region8: #{tpu_custom_call.1} parent=1 // pred_region
      %28 = vsyncadd [#allocation6], 0
      %s30 = sshll.u32 %s1, 4
      %s31 = int_to_ptr.hbm [resolvable:$true] %s30
      %s32 = sshll.u32 [#allocation5], 4
      %s33 = int_to_ptr.vmem [resolvable:$true] %s32
      %35 = dma.hbm_to_vmem [thread:$0]  %s31, 128, %s33, [#allocation6]
    $region9: #{tpu_custom_call.1} parent=1 // pred_fallthru
      _
    // Predicated region
    $region10: #{tpu_custom_call.1} parent=1 // pred_check
      _
    $region11: #{tpu_custom_call.1} parent=1 // pred_check_branch
      %37 = sbr.rel (0) target = $region13
    $region12: #{tpu_custom_call.1} parent=1 // pred_region
      %39 = vsyncadd [#allocation6], 0
      %s40 = sshll.u32 %s2, 4
      %s41 = int_to_ptr.hbm [resolvable:$true] %s40
      %s42 = sshll.u32 [#allocation7], 4
      %s43 = int_to_ptr.vmem [resolvable:$true] %s42
      %48 = dma.hbm_to_vmem [thread:$0]  %s41, 256, %s43, [#allocation6], 64, 64, 4
    $region13: #{tpu_custom_call.1} parent=1 // pred_fallthru
      _
    // Predicated region
    $region14: #{tpu_custom_call.1} parent=1 // pred_check
      _
    $region15: #{tpu_custom_call.1} parent=1 // pred_check_branch
      %50 = sbr.rel (0) target = $region17
    $region16: #{tpu_custom_call.1} parent=1 // pred_region
      %52 = vsyncadd [#allocation9], 0
      %s53 = sshll.u32 %s3, 4
      %s54 = int_to_ptr.hbm [resolvable:$true] %s53
      %s55 = sshll.u32 [#allocation8], 4
      %s56 = int_to_ptr.vmem [resolvable:$true] %s55
      %61 = dma.hbm_to_vmem [thread:$0]  %s54, 192, %s56, [#allocation9], 64, 64, 4
    $region17: #{tpu_custom_call.1} parent=1 // pred_fallthru
      _
    // Predicated region
    $region18: #{tpu_custom_call.1} parent=1 // pred_check
      _
    $region19: #{tpu_custom_call.1} parent=1 // pred_check_branch
      %63 = sbr.rel (0) target = $region21
    $region20: #{tpu_custom_call.1} parent=1 // pred_region
      _
    $region21: #{tpu_custom_call.1} parent=1 // pred_fallthru
      _
    // Predicated region
    $region22: #{tpu_custom_call.1} parent=1 // pred_check
      _
    $region23: #{tpu_custom_call.1} parent=1 // pred_check_branch
      %65 = sbr.rel (0) target = $region25
    $region24: #{tpu_custom_call.1} parent=1 // pred_region
      %67 = dma.done [#allocation3], 128
    $region25: #{tpu_custom_call.1} parent=1 // pred_fallthru
      _
    // Predicated region
    $region26: #{tpu_custom_call.1} parent=1 // pred_check
      _
    $region27: #{tpu_custom_call.1} parent=1 // pred_check_branch
      %69 = sbr.rel (0) target = $region29
    $region28: #{tpu_custom_call.1} parent=1 // pred_region
      %71 = dma.done [#allocation6], 128
    $region29: #{tpu_custom_call.1} parent=1 // pred_fallthru
      _
    // Predicated region
    $region30: #{tpu_custom_call.1} parent=1 // pred_check
      _
    $region31: #{tpu_custom_call.1} parent=1 // pred_check_branch
      %73 = sbr.rel (0) target = $region33
    $region32: #{tpu_custom_call.1} parent=1 // pred_region
      %75 = dma.done [#allocation6], 256
    $region33: #{tpu_custom_call.1} parent=1 // pred_fallthru
      _
    // Predicated region
    $region34: #{tpu_custom_call.1} parent=1 // pred_check
      _
    $region35: #{tpu_custom_call.1} parent=1 // pred_check_branch
      %77 = sbr.rel (0) target = $region37
    $region36: #{tpu_custom_call.1} parent=1 // pred_region
      %79 = dma.done [#allocation9], 192
    $region37: #{tpu_custom_call.1} parent=1 // pred_fallthru
      _
    %v80 = vld [vmem:[#allocation2] sm:$0xff]
    %v81 = vld [vmem:[#allocation7] sm:$0xf]
    %v82 = vld [vmem:[#allocation7 + $0x4] sm:$0xf]
    %v83 = vld [vmem:[#allocation7 + $0x8] sm:$0xf]
    %v84 = vld [vmem:[#allocation7 + $0xc] sm:$0xf]
    %v85 = vunpack.c.l.bf16 %v81
    %v86 = vunpack.c.l.bf16 %v82
    %v87 = vunpack.c.l.bf16 %v83
    %v88 = vunpack.c.l.bf16 %v84
    %v89 = vld [vmem:[#allocation5] sm:$0xff]
    %v90 = vld [vmem:[#allocation8] sm:$0xf]
    %v91 = vld [vmem:[#allocation8 + $0x4] sm:$0xf]
    %v92 = vld [vmem:[#allocation8 + $0x8] sm:$0xf]
    %v93 = vunpack.c.l.bf16 %v90
    %v94 = vunpack.c.l.bf16 %v91
    %v95 = vunpack.c.l.bf16 %v92
    %vm96 = vcmask 195584
    %v98 = vsel %vm96, %v89, 0
    %100 = vmatpush.msra.mxu0 0.0
    %101 = vmatpush.msra.mxu0 0.0
    %102 = vmatpush.msra.mxu0 0.0
    %103 = vmatpush.msra.mxu0 0.0
    %104 = vmatpush.msra.mxu0 0.0
    %105 = vmatpush.msra.mxu0 0.0
    %106 = vmatpush.msra.mxu0 0.0
    %107 = vmatpush.msra.mxu0 0.0
    %108 = vmatpush.msra.mxu0 0.0
    %109 = vmatpush.msra.mxu0 0.0
    %110 = vmatpush.msra.mxu0 0.0
    %111 = vmatpush.msra.mxu0 0.0
    %112 = vmatpush.msra.mxu0 0.0
    %113 = vmatpush.msra.mxu0 %v95
    %114 = vmatpush.msra.mxu0 %v94
    %115 = vmatpush.msra.mxu0 %v93
    %116 = vmatmul.f32.gmra.mxu0 %v98
    %v117 = vpop.f32.mrf.mxu0
    %v118 = vadd.f32 0.0, %v117
    %119 = vdwg.mxu0
    %vm120 = vcmask 261120
    %v122 = vsel %vm120, %v80, 0
    %124 = vmatpush.msra.mxu0 0.0
    %125 = vmatpush.msra.mxu0 0.0
    %126 = vmatpush.msra.mxu0 0.0
    %127 = vmatpush.msra.mxu0 0.0
    %128 = vmatpush.msra.mxu0 0.0
    %129 = vmatpush.msra.mxu0 0.0
    %130 = vmatpush.msra.mxu0 0.0
    %131 = vmatpush.msra.mxu0 0.0
    %132 = vmatpush.msra.mxu0 0.0
    %133 = vmatpush.msra.mxu0 0.0
    %134 = vmatpush.msra.mxu0 0.0
    %135 = vmatpush.msra.mxu0 0.0
    %136 = vmatpush.msra.mxu0 %v88
    %137 = vmatpush.msra.mxu0 %v87
    %138 = vmatpush.msra.mxu0 %v86
    %139 = vmatpush.msra.mxu0 %v85
    %140 = vmatmul.f32.gmra.mxu0 %v122
    %v141 = vpop.f32.mrf.mxu0
    %v142 = vadd.f32 %v118, %v141
    %143 = vdwg.mxu0
    %v144 = vld [vmem:[%s4] sm:$0x1]
    %v146 = vperm.slane %v144, 0
    %v148 = vadd.f32 %v142, %v146
    %149 = vst [vmem:[#allocation10] sm:$0xff] %v148
    // Predicated region
    $region38: #{tpu_custom_call.1} parent=1 // pred_check
      _
    $region39: #{tpu_custom_call.1} parent=1 // pred_check_branch
      %151 = sbr.rel (0) target = $region41
    $region40: #{tpu_custom_call.1} parent=1 // pred_region
      %153 = vsyncadd [#allocation4], 0
      %s155 = sshll.u32 [#allocation10], 4
      %s156 = int_to_ptr.vmem [resolvable:$true] %s155
      %s157 = sshll.u32 %s5, 4
      %s158 = int_to_ptr.hbm [resolvable:$true] %s157
      %160 = dma.vmem_to_hbm [thread:$0]  %s156, 128, %s158, [#allocation4]
    $region41: #{tpu_custom_call.1} parent=1 // pred_fallthru
      _
    // Predicated region
    $region42: #{tpu_custom_call.1} parent=1 // pred_check
      _
    $region43: #{tpu_custom_call.1} parent=1 // pred_check_branch
      %162 = sbr.rel (0) target = $region45
    $region44: #{tpu_custom_call.1} parent=1 // pred_region
      %164 = dma.done [#allocation4], 128
    $region45: #{tpu_custom_call.1} parent=1 // pred_fallthru
      _
    %165 = vsyncpa [#allocation3], 1
    %166 = vsyncpa [#allocation6], 1
    %167 = vsyncpa [#allocation9], 1
    %168 = vsyncpa [#allocation4], 1

</llo_original>
